<compile_context>
chip_gen: v7x
topology: tpu7x:2x2x1
jax: 0.10.0
libtpu: 0.0.40
codegen_flags: <defaults>
</compile_context>

<pallas_src>
import math

import jax
import jax.numpy as jnp
from jax.experimental import pallas as pl
from jax.experimental.pallas import tpu as pltpu


def _relu_kernel(x_ref, o_ref):
    # Pure elementwise VPU op over the whole VMEM tile; scalar 0 broadcast avoids
    # materializing a zero tile (no extra vregs).
    o_ref[...] = jnp.maximum(x_ref[...], 0)


_SMALL_BYTES = 512 * 1024          # gridless path only for launch-bound tiny tensors
_TARGET_TILE_BYTES = 4 * 1024 * 1024   # per pipeline buffer (8 MiB double-buffered in+out)
_MIN_GRID_STEPS = 4                # >= 2 steps per TensorCore on v7x


def _choose_lanes(total):
    """Widest lane count in {1024, 512, 256, 128} dividing total, else None."""
    for lanes in (1024, 512, 256, 128):
        if total % lanes == 0:
            return lanes
    return None


def _relu_small(x, inplace=False):
    """Whole array comfortably fits in VMEM: single gridless call.

    Presents a lane-dense 2D slab when the flat size is 128-divisible so stores
    are unmasked full-lane vst; otherwise a (1, total) slab (tiny, launch-bound).
    """
    orig_shape = x.shape
    total = math.prod(orig_shape)
    lanes = _choose_lanes(total)
    if lanes is not None:
        xin = x.reshape((total // lanes, lanes))      # metadata-only reshape
    else:
        xin = x.reshape((1, total))                   # metadata-only reshape

    kwargs = {}
    if inplace:
        kwargs["input_output_aliases"] = {0: 0}

    out = pl.pallas_call(
        _relu_kernel,
        out_shape=jax.ShapeDtypeStruct(xin.shape, xin.dtype),
        in_specs=[pl.BlockSpec(memory_space=pltpu.MemorySpace.VMEM)],
        out_specs=pl.BlockSpec(memory_space=pltpu.MemorySpace.VMEM),
        **kwargs,
    )(xin)
    return out.reshape(orig_shape)


def _relu_tiled(x, inplace=False):
    """Large activations: lane-dense 2D slab, pipelined grid, ragged last block."""
    orig_shape = x.shape
    dtype = x.dtype
    itemsize = jnp.dtype(dtype).itemsize
    total = math.prod(orig_shape)

    lanes = _choose_lanes(total)
    x_flat = x.reshape((total,))
    if lanes is None:
        # Only unaligned sizes (total % 128 != 0) pay the pad copy + final slice.
        lanes = 128
        padded = pl.cdiv(total, lanes) * lanes
        x_flat = jnp.pad(x_flat, (0, padded - total))
    else:
        padded = total
    rows = padded // lanes
    x2d = x_flat.reshape((rows, lanes))

    # Per-buffer tile capped at ~4 MiB (safe on v7x's smaller VMEM, amortizes
    # per-step overhead on v5e/v6e), and capped so the grid has >= 4 steps
    # (both v7x TensorCores contribute, double-buffering engages).
    cap_rows = max(8, (_TARGET_TILE_BYTES // (lanes * itemsize)) // 8 * 8)
    quarter_rows = max(8, ((pl.cdiv(rows, _MIN_GRID_STEPS) + 7) // 8) * 8)
    block_rows = min(cap_rows, quarter_rows)
    if block_rows >= rows:
        block_rows = rows          # single full-extent block (always legal)
    grid = (pl.cdiv(rows, block_rows),)

    kwargs = {}
    if inplace:
        kwargs["input_output_aliases"] = {0: 0}

    out2d = pl.pallas_call(
        _relu_kernel,
        out_shape=jax.ShapeDtypeStruct((rows, lanes), dtype),
        grid=grid,
        in_specs=[pl.BlockSpec((block_rows, lanes), lambda i: (i, 0))],
        out_specs=pl.BlockSpec((block_rows, lanes), lambda i: (i, 0)),
        compiler_params=pltpu.CompilerParams(
            dimension_semantics=("parallel",),      # shards across v7x's 2 TCs
            vmem_limit_bytes=32 * 1024 * 1024,      # headroom over v5e's 16 MiB default
        ),
        **kwargs,
    )(x2d)

    out_flat = out2d.reshape((padded,))
    if padded != total:
        out_flat = out_flat[:total]
    return out_flat.reshape(orig_shape)


def relu_grad_forward(x, inplace=False):
    """ReLUGrad.forward(x): returns relu(x) with the same shape/dtype as x."""
    nbytes = math.prod(x.shape) * jnp.dtype(x.dtype).itemsize
    if nbytes <= _SMALL_BYTES:
        return _relu_small(x, inplace=inplace)
    return _relu_tiled(x, inplace=inplace)


if __name__ == "__main__":
    key = jax.random.PRNGKey(0)
    k1, k2, k3, k4 = jax.random.split(key, 4)

    # 1) Small NCHW conv activation (gridless, lane-dense (2, 1024) view).
    x_small = jax.random.normal(k1, (2, 4, 16, 16), dtype=jnp.float32)
    y_small = jax.block_until_ready(relu_grad_forward(x_small))
    assert y_small.shape == x_small.shape and y_small.dtype == x_small.dtype
    assert bool(jnp.allclose(y_small, jnp.maximum(x_small, 0.0))), "small relu mismatch"

    # 2) Larger CNN-style activation: 128-divisible -> no pad, lanes=1024,
    #    rows=1568, block_rows=392, grid=(4,) (>= 2 steps per v7x TC).
    x_big = jax.random.normal(k2, (2, 64, 112, 112), dtype=jnp.float32)
    y_big = jax.block_until_ready(relu_grad_forward(x_big))
    assert y_big.shape == x_big.shape and y_big.dtype == x_big.dtype
    assert bool(jnp.allclose(y_big, jnp.maximum(x_big, 0.0))), "tiled relu mismatch"

    # 3) Tiled path with a non-128-divisible size (pad + slice branch).
    x_odd = jax.random.normal(k3, (1, 1, 363, 363), dtype=jnp.float32)
    y_odd = jax.block_until_ready(relu_grad_forward(x_odd))
    assert y_odd.shape == x_odd.shape and y_odd.dtype == x_odd.dtype
    assert bool(jnp.allclose(y_odd, jnp.maximum(x_odd, 0.0))), "padded tiled relu mismatch"

    # 4) Tiny unaligned tensor (small path, (1, total) slab).
    x_tiny = jax.random.normal(k4, (3, 5, 7, 11), dtype=jnp.float32)
    y_tiny = jax.block_until_ready(relu_grad_forward(x_tiny))
    assert y_tiny.shape == x_tiny.shape and y_tiny.dtype == x_tiny.dtype
    assert bool(jnp.allclose(y_tiny, jnp.maximum(x_tiny, 0.0))), "tiny relu mismatch"

    print("KERNEL_OK")
</pallas_src>

<mosaic_0001>
module attributes {stable_mosaic.version = 11 : i64} {
  func.func @_relu_kernel(%arg0: memref<2x1024xf32, #tpu.memory_space<vmem>>, %arg1: memref<2x1024xf32, #tpu.memory_space<vmem>>) attributes {dimension_semantics = [], scalar_prefetch = 0 : i64, scratch_operands = 0 : i64, tpu.core_type = #tpu.core_type<tc>} {
    %c0 = arith.constant 0 : index
    %c0_0 = arith.constant 0 : index
    %0 = vector.load %arg0[%c0, %c0_0] : memref<2x1024xf32, #tpu.memory_space<vmem>>, vector<2x1024xf32>
    %cst = arith.constant 0.000000e+00 : f32
    %1 = vector.broadcast %cst : f32 to vector<2x1024xf32>
    %2 = arith.maximumf %0, %1 : vector<2x1024xf32>
    %c0_1 = arith.constant 0 : index
    %c0_2 = arith.constant 0 : index
    %3 = vector.load %arg1[%c0_1, %c0_2] : memref<2x1024xf32, #tpu.memory_space<vmem>>, vector<2x1024xf32>
    tpu.vector_store %arg1[%c0_1, %c0_2], %2 {strides = array<i32>} : memref<2x1024xf32, #tpu.memory_space<vmem>>, vector<2x1024xf32>,
    return
  }
}

</mosaic_0001>

<llo_original>
// kernel: tpu_custom_call.1
$region0: #{tpu_custom_call.1}
  #allocation0 [shape = 'u32[]', space=smem, size = 0x4, offset = 0x4, fixed_abs, tag = 'smem constant byte address 0x4 - core index']
  #allocation1 [shape = 'u32[144,128]{1,0:T(1,128)}', space=vmem, size = 0x12000, scoped, tag = 'internal scratch']
  %s0 = inlined_call_operand.hbm [shape: f32[2,1024], index: 0, kind: input, shape index: {}]
  %s1 = inlined_call_operand.hbm [shape: f32[2,1024], index: 1, kind: output, shape index: {}]
  %s2 = sld [smem:[#allocation0]]
  $region18: #{tpu_custom_call.1} parent=0
    _
  %s4 = ssub.s32 1, %s2
  %s5 = scalar_select 0, %s4, %s2
  $region1: #{tpu_custom_call.1} parent=0
    #allocation2 [shape = 'u8[8192]{0}', space=vmem, size = 0x2000, scoped, tag = 'input window, operand 0, single buffered']
    #allocation3 [shape = 's32[1]{0}', space=sflag, size = 0x4, scoped, tag = 'scoped memory for tpu_custom_call.1']
    #allocation4 [shape = 's32[1]{0}', space=sflag, size = 0x4, scoped, tag = 'scoped memory for tpu_custom_call.1']
    #allocation5 [shape = 'u8[8192]{0}', space=vmem, size = 0x2000, scoped, tag = 'output window, operand 0, single buffered']
    %6 = vsyncpa [#allocation3], 0
    %7 = vsyncpa [#allocation4], 0
    // Predicated region
    $region2: #{tpu_custom_call.1} parent=1 // pred_check
      _
    $region3: #{tpu_custom_call.1} parent=1 // pred_check_branch
      %9 = sbr.rel (0) target = $region5
    $region4: #{tpu_custom_call.1} parent=1 // pred_region
      %s11 = ssub.s32 256, 256
      %12 = vsyncadd [#allocation3], %s11
      %s14 = sshll.u32 [#allocation2], 4
      %s15 = int_to_ptr.vmem [resolvable:$true] %s14
      %17 = dma.hbm_to_vmem [thread:$0]  %s0, 256, %s15, [#allocation3]
    $region5: #{tpu_custom_call.1} parent=1 // pred_fallthru
      _
    // Predicated region
    $region6: #{tpu_custom_call.1} parent=1 // pred_check
      _
    $region7: #{tpu_custom_call.1} parent=1 // pred_check_branch
      %19 = sbr.rel (0) target = $region9
    $region8: #{tpu_custom_call.1} parent=1 // pred_region
      %20 = dma.done [#allocation3], 256
    $region9: #{tpu_custom_call.1} parent=1 // pred_fallthru
      _
    %v21 = vld [vmem:[#allocation2] sm:$0xff]
    %v22 = vld [vmem:[#allocation2 + $0x8] sm:$0xff]
    %v23 = vmax.f32 %v21, 0.0
    %v24 = vmax.f32 %v22, 0.0
    %25 = vst [vmem:[#allocation5] sm:$0xff] %v23
    %26 = vst [vmem:[#allocation5 + $0x8] sm:$0xff] %v24
    // Predicated region
    $region10: #{tpu_custom_call.1} parent=1 // pred_check
      _
    $region11: #{tpu_custom_call.1} parent=1 // pred_check_branch
      %28 = sbr.rel (0) target = $region13
    $region12: #{tpu_custom_call.1} parent=1 // pred_region
      %s30 = ssub.s32 256, 256
      %31 = vsyncadd [#allocation4], %s30
      %s33 = sshll.u32 [#allocation5], 4
      %s34 = int_to_ptr.vmem [resolvable:$true] %s33
      %36 = dma.vmem_to_hbm [thread:$0]  %s34, 256, %s1, [#allocation4]
    $region13: #{tpu_custom_call.1} parent=1 // pred_fallthru
      _
    // Predicated region
    $region14: #{tpu_custom_call.1} parent=1 // pred_check
      _
    $region15: #{tpu_custom_call.1} parent=1 // pred_check_branch
      %38 = sbr.rel (0) target = $region17
    $region16: #{tpu_custom_call.1} parent=1 // pred_region
      %39 = dma.done [#allocation4], 256
    $region17: #{tpu_custom_call.1} parent=1 // pred_fallthru
      _
    %40 = vsyncpa [#allocation3], 1
    %41 = vsyncpa [#allocation4], 1

</llo_original>
